<compile_context>
chip_gen: v7x
topology: tpu7x:2x2x1
jax: 0.10.0
libtpu: 0.0.40
codegen_flags: <defaults>
</compile_context>

<pallas_src>
import functools
import math

import jax
import jax.numpy as jnp
import numpy as np
from jax.experimental import pallas as pl
from jax.experimental.pallas import tpu as pltpu

_ACC_LANES = 128       # lane width of the per-class VMEM accumulators
_MAX_TM = 32768        # upper bound on the pixel tile (power of two)
_VMEM_IO_BUDGET = 24 << 20   # budget for double-buffered input streams


def _lane_tree_reduce(x, target):
    """Pairwise-halve the lane axis of (C, W) down to (C, target).

    W and target are powers of two (>=128), so every split point is a
    multiple of 128 lanes and each add is a pure vreg-aligned VPU op.
    """
    w = x.shape[-1]
    while w > target:
        w //= 2
        x = x[:, :w] + x[:, w:]
    return x


def _tversky_stats_kernel(logits_ref, labels_ref, out_ref,
                          tp_acc, sp_acc, cnt_acc,
                          *, n_valid, num_t, t_per_split, ragged, has_idle):
    # logits_ref: (1, C, TM) float    labels_ref: (1, 1, TM) integer (any width)
    # out_ref:    (1, 1, C, 3) f32    -- [tp, sum_p, cnt] per class
    # tp/sp/cnt_acc: (C, 128) f32 lane-dense scratch accumulators
    t = pl.program_id(2)
    t_global = pl.program_id(1) * t_per_split + t   # global pixel-tile index

    @pl.when(t == 0)
    def _init():
        tp_acc[...] = jnp.zeros_like(tp_acc)
        sp_acc[...] = jnp.zeros_like(sp_acc)
        cnt_acc[...] = jnp.zeros_like(cnt_acc)

    def accumulate(masked):
        logits = logits_ref[0].astype(jnp.float32)       # (C, TM)
        labels = labels_ref[0].astype(jnp.int32)         # (1, TM)
        c, tm = logits.shape

        if masked:
            # Tail mask for the (single) ragged last pixel tile.
            pix = t_global * tm + jax.lax.broadcasted_iota(jnp.int32, (1, tm), 1)
            valid = pix < n_valid                        # (1, TM) bool
            validf = valid.astype(jnp.float32)
            # Keep exp() finite on out-of-bounds garbage in the tail.
            logits = jnp.where(valid, logits, 0.0)

        # Softmax over the class (sublane) axis.
        m = jnp.max(logits, axis=0, keepdims=True)       # (1, TM)
        e = jnp.exp(logits - m)                          # (C, TM)   (EUP)
        z = jnp.sum(e, axis=0, keepdims=True)            # (1, TM)
        r = pl.reciprocal(z, approx=True)                # EUP slot (otherwise idle)
        r = r * (2.0 - z * r)                            # Newton step -> ~f32 exact
        if masked:
            r = r * validf                               # fold tail mask into p
        p = e * r                                        # (C, TM) probabilities

        # One-hot of labels (classes on sublanes) folded into the statistics.
        cls = jax.lax.broadcasted_iota(jnp.int32, (c, tm), 0)
        hit = cls == labels                              # (C, TM) bool
        tp_c = jnp.where(hit, p, 0.0)                    # p * onehot
        if masked:
            cnt_c = jnp.where(hit, validf, 0.0)          # onehot (tail-masked)
        else:
            cnt_c = jnp.where(hit, 1.0, 0.0)             # onehot

        # Lane tree-reduction into tiny (C, 128) scratch: same add count as a
        # full-width RMW accumulator, but no extra vld/vst per input vreg.
        # NOTE: f32 accumulation keeps counts exact only up to 2^24 pixels per
        # (batch, split) partial; fine for typical segmentation volumes.
        target = tp_acc.shape[-1]
        tp_acc[...] += _lane_tree_reduce(tp_c, target)
        sp_acc[...] += _lane_tree_reduce(p, target)
        cnt_acc[...] += _lane_tree_reduce(cnt_c, target)

    active = t_global < num_t          # split 1 may have one trailing idle step
    if ragged:
        is_tail = t_global == num_t - 1
        if has_idle:
            full = jnp.logical_and(active, jnp.logical_not(is_tail))
        else:
            full = jnp.logical_not(is_tail)
        pl.when(full)(lambda: accumulate(False))     # fast path, no mask VALU work
        pl.when(is_tail)(lambda: accumulate(True))   # ragged last tile only
    else:
        if has_idle:
            pl.when(active)(lambda: accumulate(False))
        else:
            accumulate(False)

    @pl.when(t == t_per_split - 1)
    def _finalize():
        # Single packed store per (batch, split); lane reductions go to the XLU.
        tp = jnp.sum(tp_acc[...], axis=-1, keepdims=True)     # (C, 1)
        sp = jnp.sum(sp_acc[...], axis=-1, keepdims=True)
        cnt = jnp.sum(cnt_acc[...], axis=-1, keepdims=True)
        stats = jnp.concatenate([tp, sp, cnt], axis=-1)       # (C, 3)
        out_ref[...] = stats.reshape((1, 1) + stats.shape)


def _tversky_stats(logits_3d, labels_3d, *, tile_n=None):
    """logits_3d: (B, C, N) float, labels_3d: (B, 1, N) integer.

    Returns (B, S, C, 3) float32 partials [tp, sum_p, cnt]; S is the
    megacore split factor (2 when B == 1 and there are >= 2 pixel tiles).
    """
    B, C, N = logits_3d.shape
    logit_bytes = jnp.dtype(logits_3d.dtype).itemsize
    label_bytes = jnp.dtype(labels_3d.dtype).itemsize

    n_pad = pl.cdiv(N, 128) * 128
    cover = 1 << max(7, int(math.ceil(math.log2(n_pad))))   # pow2 >= n_pad

    if tile_n is None:
        per_pixel = 2 * C * logit_bytes + 2 * label_bytes    # double-buffered streams
        tm = min(_VMEM_IO_BUDGET // per_pixel, _MAX_TM)
        tm = max(tm, 128)
        tm = 1 << int(math.floor(math.log2(tm)))             # pow2 (lane-tree aligned)
        tm = max(min(tm, cover), 128)
    else:
        tm = int(tile_n)
        assert tm >= 128 and (tm & (tm - 1)) == 0, "tile_n must be a power of two >= 128"

    num_t = pl.cdiv(N, tm)
    ragged = (N % tm) != 0
    # Megacore: when B == 1 one v7x TensorCore would idle; split the pixel
    # range across a second "parallel" axis instead (no-op on v5e/v6e).
    n_split = 2 if (B == 1 and num_t >= 2) else 1
    t_per_split = pl.cdiv(num_t, n_split)
    has_idle = (t_per_split * n_split) != num_t

    kernel = functools.partial(
        _tversky_stats_kernel, n_valid=N, num_t=num_t, t_per_split=t_per_split,
        ragged=ragged, has_idle=has_idle)

    def pix_map(b, s, t):
        tg = s * t_per_split + t
        if has_idle:
            tg = jnp.minimum(tg, num_t - 1)   # idle step re-uses a valid block (skipped)
        return (b, 0, tg)

    acc_w = min(tm, _ACC_LANES)

    # Explicit VMEM budget: double-buffered I/O + generous temporary allowance,
    # clamped to stay under v7x's 64 MiB physical (and above v5e's 16 MiB default).
    io_bytes = 2 * C * tm * logit_bytes + 2 * tm * label_bytes
    temp_bytes = 16 * C * tm * 4
    vmem_limit = int(min(max(io_bytes + temp_bytes + (4 << 20), 32 << 20), 48 << 20))

    cost = pl.CostEstimate(
        flops=10 * B * C * N,
        transcendentals=B * C * N,
        bytes_accessed=B * N * (C * logit_bytes + label_bytes)
        + B * n_split * C * 3 * 4)

    return pl.pallas_call(
        kernel,
        out_shape=jax.ShapeDtypeStruct((B, n_split, C, 3), jnp.float32),
        grid_spec=pltpu.PrefetchScalarGridSpec(
            num_scalar_prefetch=0,
            grid=(B, n_split, t_per_split),
            in_specs=[
                pl.BlockSpec((1, C, tm), pix_map),
                pl.BlockSpec((1, 1, tm), pix_map),
            ],
            out_specs=pl.BlockSpec((1, 1, C, 3), lambda b, s, t: (b, s, 0, 0)),
            scratch_shapes=[
                pltpu.VMEM((C, acc_w), jnp.float32),
                pltpu.VMEM((C, acc_w), jnp.float32),
                pltpu.VMEM((C, acc_w), jnp.float32),
            ],
        ),
        compiler_params=pltpu.CompilerParams(
            dimension_semantics=("parallel", "parallel", "arbitrary"),
            vmem_limit_bytes=vmem_limit),
        cost_estimate=cost,
    )(logits_3d, labels_3d)


def mutil_tversky_loss(y_pred_logits, y_true, alpha, beta, smooth=1e-05,
                       tile_n=None):
    """Pallas implementation of MutilTverskyLoss.forward.

    y_pred_logits: (B, C, *spatial) float (NCHW / NCDHW, same as PyTorch).
    y_true:        (B, *spatial) integer class labels (uint8/int8/int32 stay
                   in their native dtype end-to-end; the kernel upcasts).
    alpha:         (C,) per-class weight vector
    beta:          scalar (see TODO at top of file)
    """
    B, C = y_pred_logits.shape[0], y_pred_logits.shape[1]

    # Glue: only reshapes, no transpose (channels stay on sublanes), and no
    # int32 materialisation of the label volume.
    logits_3d = y_pred_logits.reshape(B, C, -1)                  # (B, C, N)
    if (not jnp.issubdtype(y_true.dtype, jnp.integer)
            or jnp.dtype(y_true.dtype).itemsize > 4):
        y_true = y_true.astype(jnp.int32)
    labels_3d = y_true.reshape(B, 1, -1)                         # (B, 1, N)

    stats = _tversky_stats(logits_3d, labels_3d, tile_n=tile_n)  # (B, S, C, 3)
    stats = stats.sum(axis=(0, 1))                               # (C, 3)
    tp, sum_p, cnt = stats[:, 0], stats[:, 1], stats[:, 2]
    fp = sum_p - tp                    # sum(p * (1 - onehot))
    fn = cnt - tp                      # sum((1 - p) * onehot)

    alpha = alpha.astype(jnp.float32)
    tversky = -(tp + smooth) / (tp + alpha * fp + beta * fn + smooth)
    mask = cnt > 0
    tversky = tversky * mask.astype(tversky.dtype)
    n_present = jnp.count_nonzero(mask).astype(jnp.float32)
    # Guard the 0/0 case when no class is present (PyTorch original would NaN).
    return (tversky * alpha).sum() / jnp.maximum(n_present, 1.0)


def _reference(y_pred_logits, y_true, alpha, beta, smooth=1e-05):
    """Pure-JAX reference mirroring the PyTorch forward exactly."""
    B, C = y_pred_logits.shape[0], y_pred_logits.shape[1]
    y_pred = jax.nn.softmax(y_pred_logits.astype(jnp.float32), axis=1)
    y_pred = y_pred.reshape(B, C, -1)                         # (B, C, N)
    y_true = y_true.astype(jnp.int32).reshape(B, -1)          # (B, N)
    y_true_oh = jax.nn.one_hot(y_true, C, dtype=jnp.float32)  # (B, N, C)
    y_true_oh = jnp.transpose(y_true_oh, (0, 2, 1))           # (B, C, N)
    bg_true = 1.0 - y_true_oh
    bg_pred = 1.0 - y_pred
    tp = jnp.sum(y_pred * y_true_oh, axis=(0, 2))
    fp = jnp.sum(y_pred * bg_true, axis=(0, 2))
    fn = jnp.sum(bg_pred * y_true_oh, axis=(0, 2))
    tversky = -(tp + smooth) / (tp + alpha * fp + beta * fn + smooth)
    mask = y_true_oh.sum((0, 2)) > 0
    tversky = tversky * mask.astype(tversky.dtype)
    return (tversky * alpha).sum() / jnp.count_nonzero(mask).astype(jnp.float32)


if __name__ == "__main__":
    key = jax.random.PRNGKey(0)
    k1, k2, k3, k4, k5, k6 = jax.random.split(key, 6)

    alpha = jnp.array([0.1, 1.0, 1.0, 1.0], dtype=jnp.float32)
    beta = 0.5

    # Case 1: NCHW with lane-aligned pixel count (fast path, no tail mask).
    B, C, H, W = 2, 4, 16, 16          # N = 256
    logits1 = jax.random.normal(k1, (B, C, H, W), dtype=jnp.float32)
    labels1 = jax.random.randint(k2, (B, H, W), 0, C, dtype=jnp.int32)
    loss1 = jax.block_until_ready(mutil_tversky_loss(logits1, labels1, alpha, beta))
    ref1 = _reference(logits1, labels1, alpha, beta)
    if not np.allclose(np.asarray(loss1), np.asarray(ref1), rtol=1e-5, atol=1e-5):
        raise AssertionError(f"case1 mismatch: pallas={loss1} ref={ref1}")

    # Case 2: ragged spatial size + uint8 labels (tail-mask path, narrow labels).
    H2, W2 = 15, 17                    # N = 255, not a multiple of 128
    logits2 = jax.random.normal(k3, (B, C, H2, W2), dtype=jnp.float32)
    labels2 = jax.random.randint(k4, (B, H2, W2), 0, C,
                                 dtype=jnp.int32).astype(jnp.uint8)
    loss2 = jax.block_until_ready(mutil_tversky_loss(logits2, labels2, alpha, beta))
    ref2 = _reference(logits2, labels2, alpha, beta)
    if not np.allclose(np.asarray(loss2), np.asarray(ref2), rtol=1e-5, atol=1e-5):
        raise AssertionError(f"case2 mismatch: pallas={loss2} ref={ref2}")

    # Case 3: B == 1 with a forced small tile so the megacore pixel-split,
    # the idle trailing step and the ragged tail are all exercised.
    H3, W3 = 17, 31                    # N = 527 -> 5 tiles of 128, split 3+2(+idle)
    logits3 = jax.random.normal(k5, (1, C, H3, W3), dtype=jnp.float32)
    labels3 = jax.random.randint(k6, (1, H3, W3), 0, C, dtype=jnp.int32)
    loss3 = jax.block_until_ready(
        mutil_tversky_loss(logits3, labels3, alpha, beta, tile_n=128))
    ref3 = _reference(logits3, labels3, alpha, beta)
    if not np.allclose(np.asarray(loss3), np.asarray(ref3), rtol=1e-5, atol=1e-5):
        raise AssertionError(f"case3 mismatch: pallas={loss3} ref={ref3}")

    print("KERNEL_OK")
</pallas_src>

<mosaic_0001>
module attributes {stable_mosaic.version = 11 : i64} {
  func.func @_tversky_stats_kernel(%arg0: i32, %arg1: i32, %arg2: i32, %arg3: memref<1x4x256xf32, #tpu.memory_space<vmem>>, %arg4: memref<1x1x256xi32, #tpu.memory_space<vmem>>, %arg5: memref<1x1x4x3xf32, #tpu.memory_space<vmem>>, %arg6: memref<4x128xf32, #tpu.memory_space<vmem>>, %arg7: memref<4x128xf32, #tpu.memory_space<vmem>>, %arg8: memref<4x128xf32, #tpu.memory_space<vmem>>) attributes {dimension_semantics = [#tpu.dimension_semantics<parallel>, #tpu.dimension_semantics<parallel>, #tpu.dimension_semantics<arbitrary>], iteration_bounds = array<i64: 2, 1, 1>, scalar_prefetch = 0 : i64, scratch_operands = 3 : i64, tpu.core_type = #tpu.core_type<tc>, window_params = [{transform_indices = @transform_0, window_bounds = array<i64: 1, 4, 256>}, {transform_indices = @transform_1, window_bounds = array<i64: 1, 1, 256>}, {transform_indices = @transform_2, window_bounds = array<i64: 1, 1, 4, 3>}]} {
    %c0_i32 = arith.constant 0 : i32
    %0 = arith.cmpi eq, %arg2, %c0_i32 : i32
    %1 = arith.extui %0 : i1 to i32
    %c0_i32_0 = arith.constant 0 : i32
    %2 = arith.cmpi ne, %1, %c0_i32_0 : i32
    scf.if %2 {
      %cst_25 = arith.constant 0.000000e+00 : f32
      %50 = vector.broadcast %cst_25 : f32 to vector<4x128xf32>
      %c0_26 = arith.constant 0 : index
      %c0_27 = arith.constant 0 : index
      %51 = vector.load %arg6[%c0_26, %c0_27] : memref<4x128xf32, #tpu.memory_space<vmem>>, vector<4x128xf32>
      tpu.vector_store %arg6[%c0_26, %c0_27], %50 {strides = array<i32>} : memref<4x128xf32, #tpu.memory_space<vmem>>, vector<4x128xf32>,
      %cst_28 = arith.constant 0.000000e+00 : f32
      %52 = vector.broadcast %cst_28 : f32 to vector<4x128xf32>
      %c0_29 = arith.constant 0 : index
      %c0_30 = arith.constant 0 : index
      %53 = vector.load %arg7[%c0_29, %c0_30] : memref<4x128xf32, #tpu.memory_space<vmem>>, vector<4x128xf32>
      tpu.vector_store %arg7[%c0_29, %c0_30], %52 {strides = array<i32>} : memref<4x128xf32, #tpu.memory_space<vmem>>, vector<4x128xf32>,
      %cst_31 = arith.constant 0.000000e+00 : f32
      %54 = vector.broadcast %cst_31 : f32 to vector<4x128xf32>
      %c0_32 = arith.constant 0 : index
      %c0_33 = arith.constant 0 : index
      %55 = vector.load %arg8[%c0_32, %c0_33] : memref<4x128xf32, #tpu.memory_space<vmem>>, vector<4x128xf32>
      tpu.vector_store %arg8[%c0_32, %c0_33], %54 {strides = array<i32>} : memref<4x128xf32, #tpu.memory_space<vmem>>, vector<4x128xf32>,
    } else {
    }
    %c0 = arith.constant 0 : index
    %c0_1 = arith.constant 0 : index
    %c0_2 = arith.constant 0 : index
    %3 = vector.load %arg3[%c0, %c0_1, %c0_2] : memref<1x4x256xf32, #tpu.memory_space<vmem>>, vector<1x4x256xf32>
    %4 = vector.shape_cast %3 : vector<1x4x256xf32> to vector<4x256xf32>
    %c0_3 = arith.constant 0 : index
    %c0_4 = arith.constant 0 : index
    %c0_5 = arith.constant 0 : index
    %5 = vector.load %arg4[%c0_3, %c0_4, %c0_5] : memref<1x1x256xi32, #tpu.memory_space<vmem>>, vector<1x1x256xi32>
    %6 = vector.shape_cast %5 : vector<1x1x256xi32> to vector<1x256xi32>
    %cst = arith.constant dense<0xFF800000> : vector<256xf32>
    %7 = vector.multi_reduction <maximumf>, %4, %cst [0] : vector<4x256xf32> to vector<256xf32>
    %8 = vector.shape_cast %7 : vector<256xf32> to vector<1x256xf32>
    %9 = vector.broadcast %8 : vector<1x256xf32> to vector<4x256xf32>
    %10 = arith.subf %4, %9 : vector<4x256xf32>
    %11 = math.exp %10 : vector<4x256xf32>
    %cst_6 = arith.constant dense<0.000000e+00> : vector<256xf32>
    %12 = vector.multi_reduction <add>, %11, %cst_6 [0] : vector<4x256xf32> to vector<256xf32>
    %13 = vector.shape_cast %12 : vector<256xf32> to vector<1x256xf32>
    %14 = tpu.reciprocal %13 {approx = true} : vector<1x256xf32> -> vector<1x256xf32>
    %15 = arith.mulf %13, %14 : vector<1x256xf32>
    %cst_7 = arith.constant 2.000000e+00 : f32
    %16 = vector.broadcast %cst_7 : f32 to vector<1x256xf32>
    %17 = arith.subf %16, %15 : vector<1x256xf32>
    %18 = arith.mulf %14, %17 : vector<1x256xf32>
    %19 = vector.broadcast %18 : vector<1x256xf32> to vector<4x256xf32>
    %20 = arith.mulf %11, %19 : vector<4x256xf32>
    %21 = tpu.iota {dimensions = array<i32: 0>} : vector<4x256xi32>
    %22 = vector.broadcast %6 : vector<1x256xi32> to vector<4x256xi32>
    %23 = arith.cmpi eq, %21, %22 : vector<4x256xi32>
    %cst_8 = arith.constant 0.000000e+00 : f32
    %24 = vector.broadcast %cst_8 : f32 to vector<4x256xf32>
    %25 = arith.select %23, %20, %24 : vector<4x256xi1>, vector<4x256xf32>
    %cst_9 = arith.constant 1.000000e+00 : f32
    %cst_10 = arith.constant 0.000000e+00 : f32
    %26 = vector.broadcast %cst_9 : f32 to vector<4x256xf32>
    %27 = vector.broadcast %cst_10 : f32 to vector<4x256xf32>
    %28 = arith.select %23, %26, %27 : vector<4x256xi1>, vector<4x256xf32>
    %c0_11 = arith.constant 0 : index
    %c0_12 = arith.constant 0 : index
    %29 = vector.load %arg6[%c0_11, %c0_12] : memref<4x128xf32, #tpu.memory_space<vmem>>, vector<4x128xf32>
    %30 = vector.extract_strided_slice %25 {offsets = [0, 0], sizes = [4, 128], strides = [1, 1]} : vector<4x256xf32> to vector<4x128xf32>
    %31 = vector.extract_strided_slice %25 {offsets = [0, 128], sizes = [4, 128], strides = [1, 1]} : vector<4x256xf32> to vector<4x128xf32>
    %32 = arith.addf %30, %31 : vector<4x128xf32>
    %33 = arith.addf %29, %32 : vector<4x128xf32>
    %c0_13 = arith.constant 0 : index
    %c0_14 = arith.constant 0 : index
    %34 = vector.load %arg6[%c0_13, %c0_14] : memref<4x128xf32, #tpu.memory_space<vmem>>, vector<4x128xf32>
    tpu.vector_store %arg6[%c0_13, %c0_14], %33 {strides = array<i32>} : memref<4x128xf32, #tpu.memory_space<vmem>>, vector<4x128xf32>,
    %c0_15 = arith.constant 0 : index
    %c0_16 = arith.constant 0 : index
    %35 = vector.load %arg7[%c0_15, %c0_16] : memref<4x128xf32, #tpu.memory_space<vmem>>, vector<4x128xf32>
    %36 = vector.extract_strided_slice %20 {offsets = [0, 0], sizes = [4, 128], strides = [1, 1]} : vector<4x256xf32> to vector<4x128xf32>
    %37 = vector.extract_strided_slice %20 {offsets = [0, 128], sizes = [4, 128], strides = [1, 1]} : vector<4x256xf32> to vector<4x128xf32>
    %38 = arith.addf %36, %37 : vector<4x128xf32>
    %39 = arith.addf %35, %38 : vector<4x128xf32>
    %c0_17 = arith.constant 0 : index
    %c0_18 = arith.constant 0 : index
    %40 = vector.load %arg7[%c0_17, %c0_18] : memref<4x128xf32, #tpu.memory_space<vmem>>, vector<4x128xf32>
    tpu.vector_store %arg7[%c0_17, %c0_18], %39 {strides = array<i32>} : memref<4x128xf32, #tpu.memory_space<vmem>>, vector<4x128xf32>,
    %c0_19 = arith.constant 0 : index
    %c0_20 = arith.constant 0 : index
    %41 = vector.load %arg8[%c0_19, %c0_20] : memref<4x128xf32, #tpu.memory_space<vmem>>, vector<4x128xf32>
    %42 = vector.extract_strided_slice %28 {offsets = [0, 0], sizes = [4, 128], strides = [1, 1]} : vector<4x256xf32> to vector<4x128xf32>
    %43 = vector.extract_strided_slice %28 {offsets = [0, 128], sizes = [4, 128], strides = [1, 1]} : vector<4x256xf32> to vector<4x128xf32>
    %44 = arith.addf %42, %43 : vector<4x128xf32>
    %45 = arith.addf %41, %44 : vector<4x128xf32>
    %c0_21 = arith.constant 0 : index
    %c0_22 = arith.constant 0 : index
    %46 = vector.load %arg8[%c0_21, %c0_22] : memref<4x128xf32, #tpu.memory_space<vmem>>, vector<4x128xf32>
    tpu.vector_store %arg8[%c0_21, %c0_22], %45 {strides = array<i32>} : memref<4x128xf32, #tpu.memory_space<vmem>>, vector<4x128xf32>,
    %c0_i32_23 = arith.constant 0 : i32
    %47 = arith.cmpi eq, %arg2, %c0_i32_23 : i32
    %48 = arith.extui %47 : i1 to i32
    %c0_i32_24 = arith.constant 0 : i32
    %49 = arith.cmpi ne, %48, %c0_i32_24 : i32
    scf.if %49 {
      %c0_25 = arith.constant 0 : index
      %c0_26 = arith.constant 0 : index
      %50 = vector.load %arg6[%c0_25, %c0_26] : memref<4x128xf32, #tpu.memory_space<vmem>>, vector<4x128xf32>
      %cst_27 = arith.constant dense<0.000000e+00> : vector<4xf32>
      %51 = vector.multi_reduction <add>, %50, %cst_27 [1] : vector<4x128xf32> to vector<4xf32>
      %52 = vector.shape_cast %51 : vector<4xf32> to vector<4x1xf32>
      %c0_28 = arith.constant 0 : index
      %c0_29 = arith.constant 0 : index
      %53 = vector.load %arg7[%c0_28, %c0_29] : memref<4x128xf32, #tpu.memory_space<vmem>>, vector<4x128xf32>
      %cst_30 = arith.constant dense<0.000000e+00> : vector<4xf32>
      %54 = vector.multi_reduction <add>, %53, %cst_30 [1] : vector<4x128xf32> to vector<4xf32>
      %55 = vector.shape_cast %54 : vector<4xf32> to vector<4x1xf32>
      %c0_31 = arith.constant 0 : index
      %c0_32 = arith.constant 0 : index
      %56 = vector.load %arg8[%c0_31, %c0_32] : memref<4x128xf32, #tpu.memory_space<vmem>>, vector<4x128xf32>
      %cst_33 = arith.constant dense<0.000000e+00> : vector<4xf32>
      %57 = vector.multi_reduction <add>, %56, %cst_33 [1] : vector<4x128xf32> to vector<4xf32>
      %58 = vector.shape_cast %57 : vector<4xf32> to vector<4x1xf32>
      %59 = tpu.concatenate %52, %55, %58 in 1 : vector<4x1xf32>, vector<4x1xf32>, vector<4x1xf32> -> vector<4x3xf32>
      %60 = vector.shape_cast %59 : vector<4x3xf32> to vector<1x1x4x3xf32>
      %c0_34 = arith.constant 0 : index
      %c0_35 = arith.constant 0 : index
      %c0_36 = arith.constant 0 : index
      %c0_37 = arith.constant 0 : index
      %61 = vector.load %arg5[%c0_34, %c0_35, %c0_36, %c0_37] : memref<1x1x4x3xf32, #tpu.memory_space<vmem>>, vector<1x1x4x3xf32>
      tpu.vector_store %arg5[%c0_34, %c0_35, %c0_36, %c0_37], %60 {strides = array<i32>} : memref<1x1x4x3xf32, #tpu.memory_space<vmem>>, vector<1x1x4x3xf32>,
    } else {
    }
    return
  }
  func.func @transform_0(%arg0: i32, %arg1: i32, %arg2: i32) -> (i32, i32, i32) {
    %c1_i32 = arith.constant 1 : i32
    %0 = arith.muli %arg1, %c1_i32 : i32
    %1 = arith.addi %0, %arg2 : i32
    %c0_i32 = arith.constant 0 : i32
    %c0_i32_0 = arith.constant 0 : i32
    return %arg0, %c0_i32, %1 : i32, i32, i32
  }
  func.func @transform_1(%arg0: i32, %arg1: i32, %arg2: i32) -> (i32, i32, i32) {
    %c1_i32 = arith.constant 1 : i32
    %0 = arith.muli %arg1, %c1_i32 : i32
    %1 = arith.addi %0, %arg2 : i32
    %c0_i32 = arith.constant 0 : i32
    %c0_i32_0 = arith.constant 0 : i32
    return %arg0, %c0_i32, %1 : i32, i32, i32
  }
  func.func @transform_2(%arg0: i32, %arg1: i32, %arg2: i32) -> (i32, i32, i32, i32) {
    %c0_i32 = arith.constant 0 : i32
    %c0_i32_0 = arith.constant 0 : i32
    %c0_i32_1 = arith.constant 0 : i32
    return %arg0, %arg1, %c0_i32, %c0_i32_0 : i32, i32, i32, i32
  }
}

</mosaic_0001>

<llo_original>
// kernel: tpu_custom_call.1
$region0: #{tpu_custom_call.1}
  #allocation0 [shape = 'u32[]', space=smem, size = 0x4, offset = 0x4, fixed_abs, tag = 'smem constant byte address 0x4 - core index']
  #allocation1 [shape = 'u32[144,128]{1,0:T(1,128)}', space=vmem, size = 0x12000, scoped, tag = 'internal scratch']
  #allocation2 [shape = 'f32[4,128]{1,0:T(4,128)}', space=vmem, size = 0x800, scoped, tag = 'scratch operand']
  #allocation3 [shape = 'f32[4,128]{1,0:T(4,128)}', space=vmem, size = 0x800, scoped, tag = 'scratch operand']
  #allocation4 [shape = 'f32[4,128]{1,0:T(4,128)}', space=vmem, size = 0x800, scoped, tag = 'scratch operand']
  %s0 = inlined_call_operand.hbm [shape: f32[2,4,256], index: 0, kind: input, shape index: {}]
  %s1 = inlined_call_operand.hbm [shape: s32[2,1,256], index: 1, kind: input, shape index: {}]
  %s2 = inlined_call_operand.vmem [shape: f32[2,1,4,3], index: 2, kind: output, shape index: {}]
  %s3 = sld [smem:[#allocation0]]
  $region57: #{tpu_custom_call.1} parent=0
    _
  %s5 = ssub.s32 1, %s3
  %s6 = scalar_select 0, %s5, %s3
  $region1: #{tpu_custom_call.1} parent=0
    #allocation5 [shape = 'u8[8192]{0}', space=vmem, size = 0x2000, scoped, tag = 'input window, operand 0']
    #allocation6 [shape = 's32[2]{0}', space=sflag, size = 0x8, scoped, tag = 'scoped memory for tpu_custom_call.1']
    #allocation7 [shape = 'u8[2048]{0}', space=vmem, size = 0x800, scoped, tag = 'input window, operand 1']
    #allocation8 [shape = 's32[2]{0}', space=sflag, size = 0x8, scoped, tag = 'scoped memory for tpu_custom_call.1']
    %7 = vsyncpa [#allocation6], 0
    %s8 = scalar_lea.sflag [#allocation6], 1
    %9 = vsyncpa %s8, 0
    %10 = vsyncpa [#allocation8], 0
    %s11 = scalar_lea.sflag [#allocation8], 1
    %12 = vsyncpa %s11, 0
    loop: start=0, step=1, limit=4
    $region2: #{tpu_custom_call.1} parent=1 // loop_pre_header
      _
    $region3: #{tpu_custom_call.1} parent=1 // loop_header
      %s14 = sphi 0, %s18
      %p15 = scmp.ge.s32.totalorder %s14, 4
      %s21 = sphi 0, %s40
      %s22 = sphi 0, %s36
      %s23 = sphi 0, %s32
      %s24 = sphi 0, %s21
      %s25 = sphi 0, %s22
      %s26 = sphi 0, %s23
      %s27 = sphi 0, %s24
      %s28 = sphi 0, %s25
      %s29 = sphi 0, %s26
      %s47 = sphi 0, %s49
      %s50 = sphi 0, %s47
      %s51 = sphi 0, %s50
      %s67 = sphi 0, %s51
      %s77 = sphi 0, %s79
      %s80 = sphi 0, %s77
      %s81 = sphi 0, %s80
      %s97 = sphi 0, %s81
      %s105 = sphi 0, %s107
      %s108 = sphi 0, %s105
      %s109 = sphi 0, %s108
      %s125 = sphi 0, %s109
    $region4: #{tpu_custom_call.1} parent=1 // loop_header_branch
      %17 = sbr.rel (%p15) target = $region8
    $region5: #{tpu_custom_call.1} parent=1 // loop_body
      %s19 = ssub.s32 %s14, 1
      %s20 = ssub.s32 %s14, 2
      %s30 = sadd.s32 1, %s23
      %p31 = scmp.ge.s32.totalorder %s30, 1
      %s32 = scalar_select %p31, 0, %s30
      %s33 = sadd.s32 1, %s22
      %s34 = scalar_select %p31, %s33, %s22
      %p35 = scmp.ge.s32.totalorder %s34, 1
      %s36 = scalar_select %p35, 0, %s34
      %s37 = sadd.s32 1, %s21
      %s38 = scalar_select %p35, %s37, %s21
      %p39 = scmp.ge.s32.totalorder %s38, 2
      %s40 = scalar_select %p39, 0, %s38
      %s41 = sadd.s32 %s22, %s23
      %s42 = sadd.s32 %s36, %s32
      %s43 = ssub.s32 %s21, %s40
      %s44 = ssub.s32 %s41, %s42
      %s45 = sor.u32 %s43, %s44
      %p46 = scmp.eq.s32.totalorder %s45, 0
      %s48 = sadd.s32 %s47, 1
      %s49 = scalar_select %p46, %s47, %s48
      %p52 = pneg %p46
      %p53 = scmp.eq.s32.totalorder %s14, 1
      %p54 = por %p52, %p53
      %p55 = scmp.ne.s32.totalorder %s47, %s50
      %p56 = scmp.eq.s32.totalorder %s14, 0
      %p57 = por %p55, %p56
      %p58 = scmp.ne.s32.totalorder %s47, %s50
      %p59 = scmp.eq.s32.totalorder %s19, 1
      %p60 = por %p58, %p59
      %p61 = scmp.ne.s32.totalorder %s50, %s51
      %p62 = scmp.eq.s32.totalorder %s19, 0
      %p63 = por %p61, %p62
      %p64 = scmp.ne.s32.totalorder %s50, %s51
      %p65 = scmp.eq.s32.totalorder %s20, 1
      %p66 = por %p64, %p65
      %p68 = scmp.ne.s32.totalorder %s51, %s67
      %p69 = scmp.eq.s32.totalorder %s20, 0
      %p70 = por %p68, %p69
      %s71 = sadd.s32 %s22, %s23
      %s72 = sadd.s32 %s36, %s32
      %s73 = ssub.s32 %s21, %s40
      %s74 = ssub.s32 %s71, %s72
      %s75 = sor.u32 %s73, %s74
      %p76 = scmp.eq.s32.totalorder %s75, 0
      %s78 = sadd.s32 %s77, 1
      %s79 = scalar_select %p76, %s77, %s78
      %p82 = pneg %p76
      %p83 = scmp.eq.s32.totalorder %s14, 1
      %p84 = por %p82, %p83
      %p85 = scmp.ne.s32.totalorder %s77, %s80
      %p86 = scmp.eq.s32.totalorder %s14, 0
      %p87 = por %p85, %p86
      %p88 = scmp.ne.s32.totalorder %s77, %s80
      %p89 = scmp.eq.s32.totalorder %s19, 1
      %p90 = por %p88, %p89
      %p91 = scmp.ne.s32.totalorder %s80, %s81
      %p92 = scmp.eq.s32.totalorder %s19, 0
      %p93 = por %p91, %p92
      %p94 = scmp.ne.s32.totalorder %s80, %s81
      %p95 = scmp.eq.s32.totalorder %s20, 1
      %p96 = por %p94, %p95
      %p98 = scmp.ne.s32.totalorder %s81, %s97
      %p99 = scmp.eq.s32.totalorder %s20, 0
      %p100 = por %p98, %p99
      %s101 = ssub.s32 %s21, %s40
      %s102 = ssub.s32 %s22, %s36
      %s103 = sor.u32 %s101, %s102
      %p104 = scmp.eq.s32.totalorder %s103, 0
      %s106 = sadd.s32 %s105, 1
      %s107 = scalar_select %p104, %s105, %s106
      %p110 = pneg %p104
      %p111 = scmp.eq.s32.totalorder %s14, 1
      %p112 = por %p110, %p111
      %p113 = scmp.ne.s32.totalorder %s105, %s108
      %p114 = scmp.eq.s32.totalorder %s14, 0
      %p115 = por %p113, %p114
      %p116 = scmp.ne.s32.totalorder %s105, %s108
      %p117 = scmp.eq.s32.totalorder %s19, 1
      %p118 = por %p116, %p117
      %p119 = scmp.ne.s32.totalorder %s108, %s109
      %p120 = scmp.eq.s32.totalorder %s19, 0
      %p121 = por %p119, %p120
      %p122 = scmp.ne.s32.totalorder %s108, %s109
      %p123 = scmp.eq.s32.totalorder %s20, 1
      %p124 = por %p122, %p123
      %p126 = scmp.ne.s32.totalorder %s109, %s125
      %p127 = scmp.eq.s32.totalorder %s20, 0
      %p128 = por %p126, %p127
      %p129 = scmp.le.s32.totalorder 1, %s14
      %p130 = scmp.lt.s32.totalorder %s14, 3
      %p131 = pnand %p129, %p130
      %p132 = pneg %p131
      // Predicated region
      $region9: #{tpu_custom_call.1} parent=5 // pred_check
        _
      $region10: #{tpu_custom_call.1} parent=5 // pred_check_branch
        %134 = sbr.rel (%p131) target = $region12
      $region11: #{tpu_custom_call.1} parent=5 // pred_region
        %s135 = ssub.s32 %s14, 1
      $region12: #{tpu_custom_call.1} parent=5 // pred_fallthru
        _
      %p136 = scmp.lt.s32.totalorder %s14, 2
      // Predicated region
      $region13: #{tpu_custom_call.1} parent=5 // pred_check
        %p137 = pneg %p136
      $region14: #{tpu_custom_call.1} parent=5 // pred_check_branch
        %139 = sbr.rel (%p137) target = $region16
      $region15: #{tpu_custom_call.1} parent=5 // pred_region
        // Predicated region
        $region17: #{tpu_custom_call.1} parent=15 // pred_check
          %p140 = pneg %p57
        $region18: #{tpu_custom_call.1} parent=15 // pred_check_branch
          %142 = sbr.rel (%p140) target = $region20
        $region19: #{tpu_custom_call.1} parent=15 // pred_region
          %s143 = sand.u32 %s47, 1
          %s144 = scalar_lea.sflag [#allocation6], %s143
          %s145 = sand.u32 %s47, 1
          %s146 = smul.addr %s145, 8
          %s147 = scalar_lea.vmem [#allocation5], %s146
          %s148 = sadd.s32 %s22, %s23
          %s149 = smul.u32 2, %s148
          %s151 = ssub.s32 128, 128
          %152 = vsyncadd %s144, %s151
          %s153 = smul.addr %s21, 2
          %s154 = sadd.s32 %s149, %s153
          %s155 = smul.addr %s154, 64
          %s156 = scalar_lea.hbm %s0, %s155
          %s158 = sshll.u32 %s147, 4
          %s159 = int_to_ptr.vmem [resolvable:$true] %s158
          %161 = dma.hbm_to_vmem [thread:$0]  %s156, 128, %s159, %s144
        $region20: #{tpu_custom_call.1} parent=15 // pred_fallthru
          _
        // Predicated region
        $region21: #{tpu_custom_call.1} parent=15 // pred_check
          %p162 = pneg %p87
        $region22: #{tpu_custom_call.1} parent=15 // pred_check_branch
          %164 = sbr.rel (%p162) target = $region24
        $region23: #{tpu_custom_call.1} parent=15 // pred_region
          %s165 = sand.u32 %s77, 1
          %s166 = scalar_lea.sflag [#allocation8], %s165
          %s167 = sand.u32 %s77, 1
          %s168 = smul.addr %s167, 2
          %s169 = scalar_lea.vmem [#allocation7], %s168
          %s170 = sadd.s32 %s22, %s23
          %s171 = smul.u32 2, %s170
          %s173 = ssub.s32 32, 32
          %174 = vsyncadd %s166, %s173
          %s175 = smul.addr %s21, 2
          %s176 = sadd.s32 %s171, %s175
          %s177 = smul.addr %s176, 16
          %s178 = scalar_lea.hbm %s1, %s177
          %s180 = sshll.u32 %s169, 4
          %s181 = int_to_ptr.vmem [resolvable:$true] %s180
          %183 = dma.hbm_to_vmem [thread:$0]  %s178, 32, %s181, %s166
        $region24: #{tpu_custom_call.1} parent=15 // pred_fallthru
          _
      $region16: #{tpu_custom_call.1} parent=5 // pred_fallthru
        _
      %p184 = scmp.le.s32.totalorder 1, %s14
      %p185 = scmp.lt.s32.totalorder %s14, 3
      %p186 = pnand %p184, %p185
      %p187 = pneg %p186
      // Predicated region
      $region25: #{tpu_custom_call.1} parent=5 // pred_check
        _
      $region26: #{tpu_custom_call.1} parent=5 // pred_check_branch
        %189 = sbr.rel (%p186) target = $region28
      $region27: #{tpu_custom_call.1} parent=5 // pred_region
        %s190 = ssub.s32 %s14, 1
        %s191 = sand.u32 %s50, 1
        %s192 = scalar_lea.sflag [#allocation6], %s191
        %s193 = sand.u32 %s50, 1
        %s194 = smul.addr %s193, 8
        %s195 = scalar_lea.vmem [#allocation5], %s194
        // Predicated region
        $region29: #{tpu_custom_call.1} parent=27 // pred_check
          %p196 = pneg %p63
        $region30: #{tpu_custom_call.1} parent=27 // pred_check_branch
          %198 = sbr.rel (%p196) target = $region32
        $region31: #{tpu_custom_call.1} parent=27 // pred_region
          %199 = dma.done %s192, 128
        $region32: #{tpu_custom_call.1} parent=27 // pred_fallthru
          _
        %s200 = sand.u32 %s80, 1
        %s201 = scalar_lea.sflag [#allocation8], %s200
        %s202 = sand.u32 %s80, 1
        %s203 = smul.addr %s202, 2
        %s204 = scalar_lea.vmem [#allocation7], %s203
        // Predicated region
        $region33: #{tpu_custom_call.1} parent=27 // pred_check
          %p205 = pneg %p93
        $region34: #{tpu_custom_call.1} parent=27 // pred_check_branch
          %207 = sbr.rel (%p205) target = $region36
        $region35: #{tpu_custom_call.1} parent=27 // pred_region
          %208 = dma.done %s201, 32
        $region36: #{tpu_custom_call.1} parent=27 // pred_fallthru
          _
        %s209 = sand.u32 %s50, 1
        %s210 = scalar_lea.sflag [#allocation6], %s209
        %s211 = sand.u32 %s50, 1
        %s212 = smul.addr %s211, 8
        %s213 = scalar_lea.vmem [#allocation5], %s212
        %p214 = pneg %p63
        %p215 = pneg %p60
        %s216 = sand.u32 %s80, 1
        %s217 = scalar_lea.sflag [#allocation8], %s216
        %s218 = sand.u32 %s80, 1
        %s219 = smul.addr %s218, 2
        %s220 = scalar_lea.vmem [#allocation7], %s219
        %p221 = pneg %p93
        %p222 = pneg %p90
        %p223 = pneg %p121
        %p224 = pneg %p118
        %p225 = scmp.lt.s32.totalorder %s24, 1
        %s226 = scalar_select %p225, %s24, 1
        %p227 = scmp.lt.s32.totalorder %s25, 0
        %s228 = scalar_select %p227, %s25, 0
        %s229 = sadd.s32 %s228, %s226
        %s230 = smul.addr %s229, 4
        %s231 = scalar_lea.vmem %s2, %s230
        %s232 = sadd.s32 %s25, %s26
        %s233 = smul.u32 2, %s232
        %s234 = sadd.s32 %s25, %s26
        %s235 = smul.u32 2, %s234
        %p236 = scmp.lt.s32.totalorder %s24, 1
        %s237 = scalar_select %p236, %s24, 1
        %p238 = scmp.lt.s32.totalorder %s25, 0
        %s239 = scalar_select %p238, %s25, 0
        %s240 = sadd.s32 %s239, %s237
        %s241 = smul.addr %s240, 4
        %s242 = scalar_lea.vmem %s2, %s241
        %p243 = scmp.eq.s32.totalorder %s26, 0
        // Predicated region
        $region37: #{tpu_custom_call.1} parent=27 // pred_check
          %p244 = pneg %p243
        $region38: #{tpu_custom_call.1} parent=27 // pred_check_branch
          %246 = sbr.rel (%p244) target = $region40
        $region39: #{tpu_custom_call.1} parent=27 // pred_region
          %247 = vst [vmem:[#allocation2] sm:$0xf] 0.0
          %248 = vst [vmem:[#allocation3] sm:$0xf] 0.0
          %249 = vst [vmem:[#allocation4] sm:$0xf] 0.0
        $region40: #{tpu_custom_call.1} parent=27 // pred_fallthru
          _
        %v250 = vld [vmem:[%s195] sm:$0xff]
        %v251 = vld [vmem:[%s204] sm:$0x3]
        %v253 = vcombine.high %v250, %v250
        %vm255 = vcmask 1043456
        %v256 = vsel %vm255, %v250, -inf
        %v257 = vrot.slane %v256, 4
        %v258 = vmax.f32 %v256, %v257
        %v259 = vrot.slane %v258, 2
        %v260 = vmax.f32 %v258, %v259
        %v261 = vrot.slane %v260, 1
        %v262 = vmax.f32 %v260, %v261
        %v263 = vsel %vm255, %v253, -inf
        %v264 = vrot.slane %v263, 4
        %v265 = vmax.f32 %v263, %v264
        %v266 = vrot.slane %v265, 2
        %v267 = vmax.f32 %v265, %v266
        %v268 = vrot.slane %v267, 1
        %v269 = vmax.f32 %v267, %v268
        %v272 = vcombine.low %v262, %v269
        %v274 = vsub.f32 %v250, %v272
        %v275 = vmul.f32 %v274, 1.442695
        %v276 = vpow.pop %v275
        %v278 = vcombine.high %v276, %v276
        %v280 = vsel %vm255, %v276, 0.0
        %v281 = vrot.slane %v280, 4
        %v282 = vadd.f32 %v280, %v281
        %v283 = vrot.slane %v282, 2
        %v284 = vadd.f32 %v282, %v283
        %v285 = vrot.slane %v284, 1
        %v286 = vadd.f32 %v284, %v285
        %v287 = vsel %vm255, %v278, 0.0
        %v288 = vrot.slane %v287, 4
        %v289 = vadd.f32 %v287, %v288
        %v290 = vrot.slane %v289, 2
        %v291 = vadd.f32 %v289, %v290
        %v292 = vrot.slane %v291, 1
        %v293 = vadd.f32 %v291, %v292
        %v294 = vrcp.pop %v286
        %v295 = vrcp.pop %v293
        %v296 = vmul.f32 %v286, %v294
        %v297 = vmul.f32 %v293, %v295
        %v298 = vsub.f32 2.0, %v296
        %v299 = vsub.f32 2.0, %v297
        %v300 = vmul.f32 %v294, %v298
        %v301 = vmul.f32 %v295, %v299
        %v304 = vcombine.low %v300, %v301
        %v306 = vmul.f32 %v276, %v304
        %v307 = vlaneseq
        %v308 = vshrl.u32 %v307, 7
        %v309 = vlaneseq
        %v310 = vshrl.u32 %v309, 7
        %v311 = vsub.s32 0, %v310
        %v312 = vrot.slane %v251, %v311
        %v313 = vlaneseq
        %v314 = vshrl.u32 %v313, 7
        %v315 = vsub.s32 1, %v314
        %v316 = vrot.slane %v251, %v315
        %vm317 = vcmp.eq.s32.totalorder %v308, %v312
        %vm318 = vcmp.eq.s32.totalorder %v308, %v316
        %v320 = vcombine.high %v306, %v306
        %v322 = vsel %vm317, %v306, 0.0
        %v323 = vsel %vm318, %v320, 0.0
        %v324 = vsel %vm317, 1.0, 0.0
        %v325 = vsel %vm318, 1.0, 0.0
        %v326 = vld [vmem:[#allocation2] sm:$0xf]
        %v327 = vadd.f32 %v322, %v323
        %v328 = vadd.f32 %v326, %v327
        %329 = vst [vmem:[#allocation2] sm:$0xf] %v328
        %v330 = vld [vmem:[#allocation3] sm:$0xf]
        %v331 = vrot.slane %v306, 4
        %v333 = vadd.f32 %v306, %v331
        %v334 = vadd.f32 %v330, %v333
        %335 = vst [vmem:[#allocation3] sm:$0xf] %v334
        %v336 = vld [vmem:[#allocation4] sm:$0xf]
        %v337 = vadd.f32 %v324, %v325
        %v338 = vadd.f32 %v336, %v337
        %339 = vst [vmem:[#allocation4] sm:$0xf] %v338
        // Predicated region
        $region41: #{tpu_custom_call.1} parent=27 // pred_check
          %p340 = pneg %p243
        $region42: #{tpu_custom_call.1} parent=27 // pred_check_branch
          %342 = sbr.rel (%p340) target = $region44
        $region43: #{tpu_custom_call.1} parent=27 // pred_region
          %v343 = vld [vmem:[#allocation2] sm:$0xf]
          %v344 = vsel %vm255, %v343, 0.0
          %345 = vadd.xlane.f32.xlu0 %v344
          %v346 = vpop.xlane.xlu0 %345
          %v347 = vld [vmem:[#allocation3] sm:$0xf]
          %v348 = vsel %vm255, %v347, 0.0
          %349 = vadd.xlane.f32.xlu0 %v348
          %v350 = vpop.xlane.xlu0 %349
          %v351 = vld [vmem:[#allocation4] sm:$0xf]
          %v352 = vsel %vm255, %v351, 0.0
          %353 = vadd.xlane.f32.xlu0 %v352
          %v354 = vpop.xlane.xlu0 %353
          %vm355 = vcmask 7168
          %v356 = vsel %vm355, %v346, %v350
          %vm357 = vcmask 15360
          %v358 = vsel %vm357, %v356, %v354
          %vm359 = vcmask 19456
          %360 = vst.msk [vmem:[%s242] sm:$0xf] %vm359, %v358
        $region44: #{tpu_custom_call.1} parent=27 // pred_fallthru
          _
        %p361 = scmp.lt.s32.totalorder %s24, 1
        %s362 = scalar_select %p361, %s24, 1
        %p363 = scmp.lt.s32.totalorder %s25, 0
        %s364 = scalar_select %p363, %s25, 0
        %s365 = sadd.s32 %s364, %s362
        %s366 = smul.addr %s365, 4
        %s367 = scalar_lea.vmem %s2, %s366
        // Predicated region
        $region45: #{tpu_custom_call.1} parent=27 // pred_check
          %p368 = pneg %p118
        $region46: #{tpu_custom_call.1} parent=27 // pred_check_branch
          %370 = sbr.rel (%p368) target = $region48
        $region47: #{tpu_custom_call.1} parent=27 // pred_region
          _
        $region48: #{tpu_custom_call.1} parent=27 // pred_fallthru
          _
      $region28: #{tpu_custom_call.1} parent=5 // pred_fallthru
        _
      %p371 = scmp.le.s32.totalorder 2, %s14
      // Predicated region
      $region49: #{tpu_custom_call.1} parent=5 // pred_check
        %p372 = pneg %p371
      $region50: #{tpu_custom_call.1} parent=5 // pred_check_branch
        %374 = sbr.rel (%p372) target = $region52
      $region51: #{tpu_custom_call.1} parent=5 // pred_region
        %s375 = ssub.s32 %s14, 2
        // Predicated region
        $region53: #{tpu_custom_call.1} parent=51 // pred_check
          %p376 = pneg %p124
        $region54: #{tpu_custom_call.1} parent=51 // pred_check_branch
          %378 = sbr.rel (%p376) target = $region56
        $region55: #{tpu_custom_call.1} parent=51 // pred_region
          %p379 = scmp.lt.s32.totalorder %s27, 1
          %s380 = scalar_select %p379, %s27, 1
          %p381 = scmp.lt.s32.totalorder %s28, 0
          %s382 = scalar_select %p381, %s28, 0
          %s383 = sadd.s32 %s382, %s380
          %s384 = smul.addr %s383, 4
          %s385 = scalar_lea.vmem %s2, %s384
        $region56: #{tpu_custom_call.1} parent=51 // pred_fallthru
          _
      $region52: #{tpu_custom_call.1} parent=5 // pred_fallthru
        _
    $region6: #{tpu_custom_call.1} parent=1 // loop_footer
      %s18 = sadd.s32 1, %s14
    $region7: #{tpu_custom_call.1} parent=1 // loop_footer_branch
      %13 = sbr.rel target = $region3
    $region8: #{tpu_custom_call.1} parent=1 // loop_exit
      _
    %386 = vsyncpa [#allocation6], 1
    %s387 = scalar_lea.sflag [#allocation6], 1
    %388 = vsyncpa %s387, 1
    %389 = vsyncpa [#allocation8], 1
    %s390 = scalar_lea.sflag [#allocation8], 1
    %391 = vsyncpa %s390, 1

</llo_original>
